<compile_context>
chip_gen: v5e
topology: v5e:2x2
jax: 0.10.0
libtpu: 0.0.40
codegen_flags: <defaults>
</compile_context>

<pallas_src>
import jax
import jax.numpy as jnp
from jax.experimental import pallas as pl
from jax.experimental.pallas import tpu as pltpu

_TARGET_BLOCK_BYTES = 2 * 1024 * 1024   # ~2 MiB/block; double-buffered in+out
                                        # => ~8 MiB VMEM, fits v5e/v6e/v7x.


def _identity_kernel(x_ref, o_ref):
    # Pure copy on the hot path: DummyModule.forward(x) == x.
    o_ref[...] = x_ref[...]


def _sublane_multiple(dtype):
    # Minimum second-minor tiling per dtype: f32 -> 8, bf16 -> 16, int8/fp8 -> 32.
    return {4: 8, 2: 16, 1: 32}.get(jnp.dtype(dtype).itemsize, 8)


def dummy_module_forward(x):
    """Pallas implementation of DummyModule.forward (identity).

    NOTE: the mathematically optimal path is `return x` (zero HBM traffic); we
    still route through a Pallas kernel as required, but alias input->output
    and use wide, lane-dense ~2 MiB blocks so the copy sits near HBM roofline.
    """
    orig_shape = x.shape
    dtype = x.dtype
    n = int(x.size)
    itemsize = jnp.dtype(dtype).itemsize
    sub = _sublane_multiple(dtype)

    cost = pl.CostEstimate(flops=0, transcendentals=0,
                           bytes_accessed=2 * n * itemsize)

    # Widest lane-dense last dim (multiple of 128) that exactly divides n.
    width = None
    for w in (8192, 4096, 2048, 1024, 512, 256, 128):
        if n > 0 and n % w == 0:
            width = w
            break

    if width is None:
        # Irregular / tiny size: single full-extent block (exempt from the
        # (8,128) divisibility rule).  Whole array lives in VMEM; only small
        # shapes reach this path, so no pad/slice round-trips are needed.
        return pl.pallas_call(
            _identity_kernel,
            out_shape=jax.ShapeDtypeStruct(orig_shape, dtype),
            input_output_aliases={0: 0},
            cost_estimate=cost,
        )(x)

    rows = n // width
    x2d = x.reshape(rows, width)          # free reshape: no pad, no scatter

    # ~2 MiB blocks; tile_rows is a multiple of the sublane tiling unless the
    # block covers all rows (full-extent is exempt from the divisibility rule).
    max_rows = max(sub, (_TARGET_BLOCK_BYTES // (width * itemsize)) // sub * sub)
    tile_rows = rows if rows <= max_rows else max_rows
    grid = (pl.cdiv(rows, tile_rows),)    # partial last block handled by Pallas

    out2d = pl.pallas_call(
        _identity_kernel,
        out_shape=jax.ShapeDtypeStruct((rows, width), dtype),
        grid_spec=pltpu.PrefetchScalarGridSpec(
            num_scalar_prefetch=0,
            grid=grid,
            in_specs=[pl.BlockSpec((tile_rows, width), lambda i: (i, 0))],
            out_specs=pl.BlockSpec((tile_rows, width), lambda i: (i, 0)),
        ),
        input_output_aliases={0: 0},      # reuse the input HBM buffer
        cost_estimate=cost,
        compiler_params=pltpu.CompilerParams(
            dimension_semantics=("parallel",),   # shards grid across 2 TCs on v7x
            vmem_limit_bytes=32 * 1024 * 1024,
        ),
    )(x2d)
    return out2d.reshape(orig_shape)


if __name__ == "__main__":
    key = jax.random.PRNGKey(0)
    # Small NCHW-style input consistent with a generic forward(x).
    x = jax.random.normal(key, (2, 4, 16, 16), dtype=jnp.float32)

    y = dummy_module_forward(x)
    jax.block_until_ready(y)

    assert y.shape == x.shape and y.dtype == x.dtype
    assert bool(jnp.all(y == x))
    print("KERNEL_OK")
</pallas_src>

<mosaic_0001>
module attributes {stable_mosaic.version = 11 : i64} {
  func.func @_identity_kernel(%arg0: i32, %arg1: memref<1x2048xf32, #tpu.memory_space<vmem>>, %arg2: memref<1x2048xf32, #tpu.memory_space<vmem>>) attributes {dimension_semantics = [#tpu.dimension_semantics<parallel>], iteration_bounds = array<i64: 1>, scalar_prefetch = 0 : i64, scratch_operands = 0 : i64, tpu.core_type = #tpu.core_type<tc>, window_params = [{transform_indices = @transform_0, window_bounds = array<i64: 1, 2048>}, {transform_indices = @transform_1, window_bounds = array<i64: 1, 2048>}]} {
    %c0 = arith.constant 0 : index
    %c0_0 = arith.constant 0 : index
    %0 = vector.load %arg1[%c0, %c0_0] : memref<1x2048xf32, #tpu.memory_space<vmem>>, vector<1x2048xf32>
    %c0_1 = arith.constant 0 : index
    %c0_2 = arith.constant 0 : index
    %1 = vector.load %arg2[%c0_1, %c0_2] : memref<1x2048xf32, #tpu.memory_space<vmem>>, vector<1x2048xf32>
    tpu.vector_store %arg2[%c0_1, %c0_2], %0 {strides = array<i32>} : memref<1x2048xf32, #tpu.memory_space<vmem>>, vector<1x2048xf32>,
    return
  }
  func.func @transform_0(%arg0: i32) -> (i32, i32) {
    %c0_i32 = arith.constant 0 : i32
    %c0_i32_0 = arith.constant 0 : i32
    return %arg0, %c0_i32 : i32, i32
  }
  func.func @transform_1(%arg0: i32) -> (i32, i32) {
    %c0_i32 = arith.constant 0 : i32
    %c0_i32_0 = arith.constant 0 : i32
    return %arg0, %c0_i32 : i32, i32
  }
}

</mosaic_0001>

<llo_original>
// kernel: tpu_custom_call.1
$region0: #{tpu_custom_call.1}
  #allocation0 [shape = 'u32[]', space=smem, size = 0x4, offset = 0x4, fixed_abs, tag = 'smem constant byte address 0x4 - core index']
  #allocation1 [shape = 'u32[72,128]{1,0:T(1,128)}', space=vmem, size = 0x9000, scoped, tag = 'internal scratch']
  %s0 = inlined_call_operand.hbm [shape: f32[1,2048], index: 0, kind: input, shape index: {}, may-alias: {0,1}]
  %s1 = inlined_call_operand.hbm [shape: f32[1,2048], index: 1, kind: output, shape index: {}, may-alias: {0,1}]
  %s2 = sld [smem:[#allocation0]]
  $region18: #{tpu_custom_call.1} parent=0
    _
  %s4 = ssub.s32 1, %s2
  %s5 = scalar_select 0, %s4, %s2
  $region1: #{tpu_custom_call.1} parent=0
    #allocation2 [shape = 'u8[8192]{0}', space=vmem, size = 0x2000, scoped, tag = 'input window, operand 0, single buffered']
    #allocation3 [shape = 's32[1]{0}', space=sflag, size = 0x4, scoped, tag = 'scoped memory for tpu_custom_call.1']
    #allocation4 [shape = 's32[1]{0}', space=sflag, size = 0x4, scoped, tag = 'scoped memory for tpu_custom_call.1']
    #allocation5 [shape = 'u8[8192]{0}', space=vmem, size = 0x2000, scoped, tag = 'output window, operand 0, single buffered']
    %6 = vsyncpa [#allocation3], 0
    %7 = vsyncpa [#allocation4], 0
    // Predicated region
    $region2: #{tpu_custom_call.1} parent=1 // pred_check
      _
    $region3: #{tpu_custom_call.1} parent=1 // pred_check_branch
      %9 = sbr.rel (0) target = $region5
    $region4: #{tpu_custom_call.1} parent=1 // pred_region
      %11 = vsyncadd [#allocation3], 0
      %s13 = sshll.u32 %s0, 4
      %s14 = int_to_ptr.hbm [resolvable:$true] %s13
      %s15 = sshll.u32 [#allocation2], 4
      %s16 = int_to_ptr.vmem [resolvable:$true] %s15
      %18 = dma.hbm_to_vmem [thread:$0]  %s14, 256, %s16, [#allocation3]
    $region5: #{tpu_custom_call.1} parent=1 // pred_fallthru
      _
    // Predicated region
    $region6: #{tpu_custom_call.1} parent=1 // pred_check
      _
    $region7: #{tpu_custom_call.1} parent=1 // pred_check_branch
      %20 = sbr.rel (0) target = $region9
    $region8: #{tpu_custom_call.1} parent=1 // pred_region
      %22 = dma.done [#allocation3], 256
    $region9: #{tpu_custom_call.1} parent=1 // pred_fallthru
      _
    %v23 = vld [vmem:[#allocation2] sm:$0xff]
    %v24 = vld [vmem:[#allocation2 + $0x8] sm:$0xff]
    %25 = vst [vmem:[#allocation5] sm:$0xff] %v23
    %26 = vst [vmem:[#allocation5 + $0x8] sm:$0xff] %v24
    // Predicated region
    $region10: #{tpu_custom_call.1} parent=1 // pred_check
      _
    $region11: #{tpu_custom_call.1} parent=1 // pred_check_branch
      %28 = sbr.rel (0) target = $region13
    $region12: #{tpu_custom_call.1} parent=1 // pred_region
      %30 = vsyncadd [#allocation4], 0
      %s32 = sshll.u32 [#allocation5], 4
      %s33 = int_to_ptr.vmem [resolvable:$true] %s32
      %s34 = sshll.u32 %s1, 4
      %s35 = int_to_ptr.hbm [resolvable:$true] %s34
      %37 = dma.vmem_to_hbm [thread:$0]  %s33, 256, %s35, [#allocation4]
    $region13: #{tpu_custom_call.1} parent=1 // pred_fallthru
      _
    // Predicated region
    $region14: #{tpu_custom_call.1} parent=1 // pred_check
      _
    $region15: #{tpu_custom_call.1} parent=1 // pred_check_branch
      %39 = sbr.rel (0) target = $region17
    $region16: #{tpu_custom_call.1} parent=1 // pred_region
      %41 = dma.done [#allocation4], 256
    $region17: #{tpu_custom_call.1} parent=1 // pred_fallthru
      _
    %42 = vsyncpa [#allocation3], 1
    %43 = vsyncpa [#allocation4], 1

</llo_original>
